<compile_context>
chip_gen: v7x
topology: tpu7x:2x2x1
jax: 0.10.0
libtpu: 0.0.40
codegen_flags: <defaults>
</compile_context>

<pallas_src>
import jax
import jax.numpy as jnp
from jax.experimental import pallas as pl
from jax.experimental.pallas import tpu as pltpu


def _round_up(x, m):
    return ((x + m - 1) // m) * m


def combiner_kernel(x_ref, wf_ref, bf_ref, ww_ref, bw_ref, out_ref):
    # x_ref  : (block_b*T, D)   input timesteps (caller dtype)
    # wf_ref : (D, H_pad)       feature_net weight, bf16 (resident)
    # bf_ref : (1, H_pad)       feature_net bias, f32 (resident)
    # ww_ref : (1, H_pad)       weight_net weight transposed, f32 (resident)
    # bw_ref : (1, 1)           weight_net bias, f32 scalar in SMEM
    # out_ref: (block_b, H_pad) per-batch-row weighted-feature sums, f32
    rows, _ = x_ref.shape
    tb, hp = out_ref.shape
    t = rows // tb

    # feature_net: one large MXU pass over every timestep of the block.
    # bf16 operands (MXU-native on v6e/v7x), f32 accumulation.  The cast happens
    # in-register; a host-side cast of x would add a full extra HBM round trip.
    x_bf = x_ref[...].astype(jnp.bfloat16)
    feats = jnp.dot(x_bf, wf_ref[...], preferred_element_type=jnp.float32)
    # Post-matmul math in f32: safe/fast on v5e (no bf16 VPU/EUP), exact T-sum.
    feats = jnp.tanh(feats + bf_ref[...])                              # (rows, Hp)

    # weight_net: Linear(H, 1) as VPU multiply + XLU lane reduce (no N=1 MXU pass).
    scores = jnp.sum(feats * ww_ref[...], axis=-1, keepdims=True)      # (rows, 1)
    scores = scores + bw_ref[0, 0]

    # weighted_features = features * weights ; sum over the sequence dim T.
    weighted = feats * scores                                          # (rows, Hp)
    out_ref[...] = jnp.sum(weighted.reshape(tb, t, hp), axis=1)        # (tb, Hp)


def combiner_forward(x, wf, bf, ww, bw, *, block_b=None):
    B, T, D = x.shape
    H = wf.shape[1]
    H_pad = _round_up(H, 128)
    itemsize = jnp.dtype(x.dtype).itemsize

    # Generation-aware VMEM capacity (v5e/v6e: 128 MiB, v7x: 64 MiB physical).
    try:
        vmem_cap = int(pltpu.get_tpu_info().vmem_capacity_bytes)
    except Exception:
        vmem_cap = 64 * 1024 * 1024          # conservative (v7x) fallback

    def footprint(bb):
        return (2 * bb * T * D * itemsize            # x double buffer
                + 2 * bb * H_pad * 4                 # out double buffer
                + 3 * bb * T * H_pad * 4             # feats/weighted f32 intermediates
                + D * H_pad * 4 + 2 * H_pad * 4)     # resident weights / biases

    if block_b is None:
        # ~2 MiB of x per grid step: amortizes ~0.35 us/step overhead and keeps
        # DMAs large and contiguous.
        bytes_per_row = T * D * itemsize
        block_b = max(8, _round_up(pl.cdiv(2 * 1024 * 1024, bytes_per_row), 8))
        # Keep >= 4 grid steps when the batch allows: the "parallel" axis is what
        # shards across v7x's two TensorCores.
        if B >= 32:
            block_b = min(block_b, max(8, _round_up(pl.cdiv(B, 4), 8)))
        # Shrink until double-buffered blocks + intermediates fit comfortably.
        while block_b > 8 and footprint(block_b) > 0.4 * vmem_cap:
            block_b = max(8, _round_up(block_b // 2, 8))

    # Never exceed the batch: the partial last block is handled by Pallas with a
    # masked store, and its garbage rows land only in output rows >= B (never
    # written).  If the block doesn't span the whole batch, keep it 8-aligned.
    block_b = min(block_b, B)
    if block_b < B:
        block_b = max(8, (block_b // 8) * 8)
    grid = (pl.cdiv(B, block_b),)

    # Lane-dense H padding on the (tiny) weights only — zero-filled, so padded
    # feature columns are tanh(0)=0 and contribute nothing.  The big x tensor is
    # neither padded nor copied; collapsing (B,T,D)->(B*T,D) is free.
    x2d = x.reshape(B * T, D)
    wf_p = jnp.pad(wf, ((0, 0), (0, H_pad - H))).astype(jnp.bfloat16)
    bf_p = jnp.pad(bf.reshape(1, H), ((0, 0), (0, H_pad - H))).astype(jnp.float32)
    ww_row = jnp.pad(ww.reshape(H, 1).T, ((0, 0), (0, H_pad - H))).astype(jnp.float32)
    bw_s = bw.reshape(1, 1).astype(jnp.float32)

    vmem_limit = int(min(max(int(1.5 * footprint(block_b)), 16 * 1024 * 1024),
                         vmem_cap // 2))

    out = pl.pallas_call(
        combiner_kernel,
        out_shape=jax.ShapeDtypeStruct((B, H_pad), jnp.float32),
        grid_spec=pltpu.PrefetchScalarGridSpec(
            num_scalar_prefetch=0,
            grid=grid,
            in_specs=[
                # TODO(synk): if xprof shows exposed DMA once blocks are large, add
                # pipeline_mode=pl.Buffered(3) here (sweep 2 vs 3; mind v7x VMEM).
                pl.BlockSpec((block_b * T, D), lambda b: (b, 0)),      # x slab
                pl.BlockSpec((D, H_pad), lambda b: (0, 0)),            # feature_net W (bf16)
                pl.BlockSpec((1, H_pad), lambda b: (0, 0)),            # feature_net b
                pl.BlockSpec((1, H_pad), lambda b: (0, 0)),            # weight_net W^T
                pl.BlockSpec(memory_space=pltpu.MemorySpace.SMEM),     # weight_net b
            ],
            out_specs=pl.BlockSpec((block_b, H_pad), lambda b: (b, 0)),
        ),
        compiler_params=pltpu.CompilerParams(
            dimension_semantics=("parallel",),
            vmem_limit_bytes=vmem_limit,
        ),
    )(x2d, wf_p, bf_p, ww_row, bw_s)

    return out[:, :H]


def combiner_ref(x, wf, bf, ww, bw):
    # Pure-JAX reference mirroring the PyTorch forward exactly (f32 throughout).
    features = jnp.tanh(jnp.einsum("btd,dh->bth", x, wf) + bf)      # feature_net(x)
    weights = jnp.einsum("bth,ho->bto", features, ww) + bw          # weight_net -> (B,T,1)
    weighted_features = features * weights
    return jnp.sum(weighted_features, axis=1)                       # sum over dim=1


def _make_inputs(key, B, T, D, H):
    kx, kwf, kbf, kww, kbw = jax.random.split(key, 5)
    x = jax.random.normal(kx, (B, T, D), dtype=jnp.float32)
    wf = jax.random.normal(kwf, (D, H), dtype=jnp.float32) * 0.1
    bf = jax.random.normal(kbf, (1, H), dtype=jnp.float32) * 0.1
    ww = jax.random.normal(kww, (H, 1), dtype=jnp.float32) * 0.1
    bw = jax.random.normal(kbw, (1, 1), dtype=jnp.float32) * 0.1
    return x, wf, bf, ww, bw


if __name__ == "__main__":
    key = jax.random.PRNGKey(0)
    k1, k2 = jax.random.split(key, 2)

    # Small shape matching the module's intended use.
    B, T, D, H = 2, 8, 32, 32
    x, wf, bf, ww, bw = _make_inputs(k1, B, T, D, H)
    out = jax.block_until_ready(combiner_forward(x, wf, bf, ww, bw))
    ref = combiner_ref(x, wf, bf, ww, bw)
    assert out.shape == (B, H)
    # bf16 MXU operands with f32 accumulation -> relaxed tolerance vs f32 reference.
    assert jnp.allclose(out, ref, atol=5e-2, rtol=5e-2), (out, ref)

    # Multi-block path: grid > 1 with a partial (masked) last block and OOB x rows.
    B2 = 20
    x2, wf2, bf2, ww2, bw2 = _make_inputs(k2, B2, T, D, H)
    out2 = jax.block_until_ready(combiner_forward(x2, wf2, bf2, ww2, bw2, block_b=8))
    ref2 = combiner_ref(x2, wf2, bf2, ww2, bw2)
    assert out2.shape == (B2, H)
    assert jnp.allclose(out2, ref2, atol=5e-2, rtol=5e-2), (out2, ref2)

    print("KERNEL_OK")
</pallas_src>

<mosaic_0001>
module attributes {stable_mosaic.version = 11 : i64} {
  func.func @combiner_kernel(%arg0: i32, %arg1: memref<16x32xf32, #tpu.memory_space<vmem>>, %arg2: memref<32x128xbf16, #tpu.memory_space<vmem>>, %arg3: memref<1x128xf32, #tpu.memory_space<vmem>>, %arg4: memref<1x128xf32, #tpu.memory_space<vmem>>, %arg5: memref<1x1xf32, #tpu.memory_space<smem>>, %arg6: memref<2x128xf32, #tpu.memory_space<vmem>>) attributes {dimension_semantics = [#tpu.dimension_semantics<parallel>], iteration_bounds = array<i64: 1>, scalar_prefetch = 0 : i64, scratch_operands = 0 : i64, tpu.core_type = #tpu.core_type<tc>, window_params = [{transform_indices = @transform_0, window_bounds = array<i64: 16, 32>}, {pipeline_mode = #tpu.pipeline_mode<synchronous>, transform_indices = @transform_1, window_bounds = array<i64: 32, 128>}, {pipeline_mode = #tpu.pipeline_mode<synchronous>, transform_indices = @transform_2, window_bounds = array<i64: 1, 128>}, {pipeline_mode = #tpu.pipeline_mode<synchronous>, transform_indices = @transform_3, window_bounds = array<i64: 1, 128>}, {transform_indices = @transform_4, window_bounds = array<i64: 1, 1>}, {transform_indices = @transform_5, window_bounds = array<i64: 2, 128>}]} {
    %c0 = arith.constant 0 : index
    %c0_0 = arith.constant 0 : index
    %0 = vector.load %arg1[%c0, %c0_0] : memref<16x32xf32, #tpu.memory_space<vmem>>, vector<16x32xf32>
    %1 = arith.truncf %0 : vector<16x32xf32> to vector<16x32xbf16>
    %c0_1 = arith.constant 0 : index
    %c0_2 = arith.constant 0 : index
    %2 = vector.load %arg2[%c0_1, %c0_2] : memref<32x128xbf16, #tpu.memory_space<vmem>>, vector<32x128xbf16>
    %cst = arith.constant dense<0.000000e+00> : vector<16x128xf32>
    %3 = tpu.matmul %1, %2, %cst {dimension_numbers = #tpu.dot_dimension_numbers<[1], [0], [0], [1], [0, 0, 1, 1], [], []>} : vector<16x32xbf16>, vector<32x128xbf16>, vector<16x128xf32> -> vector<16x128xf32>
    %c0_3 = arith.constant 0 : index
    %c0_4 = arith.constant 0 : index
    %4 = vector.load %arg3[%c0_3, %c0_4] : memref<1x128xf32, #tpu.memory_space<vmem>>, vector<1x128xf32>
    %5 = vector.broadcast %4 : vector<1x128xf32> to vector<16x128xf32>
    %6 = arith.addf %3, %5 : vector<16x128xf32>
    %7 = math.tanh %6 : vector<16x128xf32>
    %c0_5 = arith.constant 0 : index
    %c0_6 = arith.constant 0 : index
    %8 = vector.load %arg4[%c0_5, %c0_6] : memref<1x128xf32, #tpu.memory_space<vmem>>, vector<1x128xf32>
    %9 = vector.broadcast %8 : vector<1x128xf32> to vector<16x128xf32>
    %10 = arith.mulf %7, %9 : vector<16x128xf32>
    %cst_7 = arith.constant dense<0.000000e+00> : vector<16xf32>
    %11 = vector.multi_reduction <add>, %10, %cst_7 [1] : vector<16x128xf32> to vector<16xf32>
    %12 = vector.shape_cast %11 : vector<16xf32> to vector<16x1xf32>
    %c0_8 = arith.constant 0 : index
    %c0_9 = arith.constant 0 : index
    %13 = memref.load %arg5[%c0_8, %c0_9] : memref<1x1xf32, #tpu.memory_space<smem>>
    %14 = vector.broadcast %13 : f32 to vector<16x1xf32>
    %15 = arith.addf %12, %14 : vector<16x1xf32>
    %16 = vector.broadcast %15 : vector<16x1xf32> to vector<16x128xf32>
    %17 = arith.mulf %7, %16 : vector<16x128xf32>
    %18 = vector.shape_cast %17 : vector<16x128xf32> to vector<2x8x128xf32>
    %cst_10 = arith.constant dense<0.000000e+00> : vector<2x128xf32>
    %19 = vector.multi_reduction <add>, %18, %cst_10 [1] : vector<2x8x128xf32> to vector<2x128xf32>
    %c0_11 = arith.constant 0 : index
    %c0_12 = arith.constant 0 : index
    %20 = vector.load %arg6[%c0_11, %c0_12] : memref<2x128xf32, #tpu.memory_space<vmem>>, vector<2x128xf32>
    tpu.vector_store %arg6[%c0_11, %c0_12], %19 {strides = array<i32>} : memref<2x128xf32, #tpu.memory_space<vmem>>, vector<2x128xf32>,
    return
  }
  func.func @transform_0(%arg0: i32) -> (i32, i32) {
    %c0_i32 = arith.constant 0 : i32
    %c0_i32_0 = arith.constant 0 : i32
    return %arg0, %c0_i32 : i32, i32
  }
  func.func @transform_1(%arg0: i32) -> (i32, i32) {
    %c0_i32 = arith.constant 0 : i32
    %c0_i32_0 = arith.constant 0 : i32
    %c0_i32_1 = arith.constant 0 : i32
    return %c0_i32, %c0_i32_0 : i32, i32
  }
  func.func @transform_2(%arg0: i32) -> (i32, i32) {
    %c0_i32 = arith.constant 0 : i32
    %c0_i32_0 = arith.constant 0 : i32
    %c0_i32_1 = arith.constant 0 : i32
    return %c0_i32, %c0_i32_0 : i32, i32
  }
  func.func @transform_3(%arg0: i32) -> (i32, i32) {
    %c0_i32 = arith.constant 0 : i32
    %c0_i32_0 = arith.constant 0 : i32
    %c0_i32_1 = arith.constant 0 : i32
    return %c0_i32, %c0_i32_0 : i32, i32
  }
  func.func @transform_4(%arg0: i32) -> (i32, i32) {
    %c0_i32 = arith.constant 0 : i32
    %c0_i32_0 = arith.constant 0 : i32
    %c0_i32_1 = arith.constant 0 : i32
    return %c0_i32, %c0_i32_0 : i32, i32
  }
  func.func @transform_5(%arg0: i32) -> (i32, i32) {
    %c0_i32 = arith.constant 0 : i32
    %c0_i32_0 = arith.constant 0 : i32
    return %arg0, %c0_i32 : i32, i32
  }
}

</mosaic_0001>

<llo_original>
// kernel: tpu_custom_call.1
$region0: #{tpu_custom_call.1}
  #allocation0 [shape = 'u32[]', space=smem, size = 0x4, offset = 0x4, fixed_abs, tag = 'smem constant byte address 0x4 - core index']
  #allocation1 [shape = 'u32[144,128]{1,0:T(1,128)}', space=vmem, size = 0x12000, scoped, tag = 'internal scratch']
  #allocation2 [shape = 'f32[1,1]{1,0:T(1,128)S(6)}', space=smem, size = 0x200, scoped, tag = 'scoped memory for tpu_custom_call.1']
  %s0 = inlined_call_operand.hbm [shape: f32[16,32], index: 0, kind: input, shape index: {}]
  %s1 = inlined_call_operand.hbm [shape: bf16[32,128], index: 1, kind: input, shape index: {}]
  %s2 = inlined_call_operand.vmem [shape: f32[1,128], index: 2, kind: input, shape index: {}]
  %s3 = inlined_call_operand.vmem [shape: f32[1,128], index: 3, kind: input, shape index: {}]
  %s4 = inlined_call_operand.<no memory space> [shape: f32[1,1], index: 4, kind: input, shape index: {}]
  %s5 = inlined_call_operand.hbm [shape: f32[2,128], index: 5, kind: output, shape index: {}]
  %s6 = sld [smem:[#allocation0]]
  $region38: #{tpu_custom_call.1} parent=0
    _
  %s8 = ssub.s32 1, %s6
  %s9 = scalar_select 0, %s8, %s6
  %10 = sst [smem:[#allocation2]] %s4
  $region1: #{tpu_custom_call.1} parent=0
    #allocation3 [shape = 'u8[8192]{0}', space=vmem, size = 0x2000, scoped, tag = 'input window, operand 0, single buffered']
    #allocation4 [shape = 's32[1]{0}', space=sflag, size = 0x4, scoped, tag = 'scoped memory for tpu_custom_call.1']
    #allocation5 [shape = 's32[1]{0}', space=sflag, size = 0x4, scoped, tag = 'scoped memory for tpu_custom_call.1']
    #allocation6 [shape = 'u8[8192]{0}', space=vmem, size = 0x2000, scoped, tag = 'input window, operand 1, single buffered']
    #allocation7 [shape = 's32[1]{0}', space=sflag, size = 0x4, scoped, tag = 'scoped memory for tpu_custom_call.1']
    #allocation8 [shape = 'u8[1024]{0}', space=vmem, size = 0x400, scoped, tag = 'output window, operand 0, single buffered']
    %11 = vsyncpa [#allocation4], 0
    %12 = vsyncpa [#allocation7], 0
    %13 = vsyncpa [#allocation5], 0
    // Predicated region
    $region2: #{tpu_custom_call.1} parent=1 // pred_check
      _
    $region3: #{tpu_custom_call.1} parent=1 // pred_check_branch
      %15 = sbr.rel (0) target = $region5
    $region4: #{tpu_custom_call.1} parent=1 // pred_region
      %s17 = ssub.s32 256, 256
      %18 = vsyncadd [#allocation4], %s17
      %s19 = sshll.u32 [#allocation3], 4
      %s20 = int_to_ptr.vmem [resolvable:$true] %s19
      %25 = dma.hbm_to_vmem [thread:$0]  %s0, 256, %s20, [#allocation4], 128, 128, 8
    $region5: #{tpu_custom_call.1} parent=1 // pred_fallthru
      _
    // Predicated region
    $region6: #{tpu_custom_call.1} parent=1 // pred_check
      _
    $region7: #{tpu_custom_call.1} parent=1 // pred_check_branch
      %27 = sbr.rel (0) target = $region9
    $region8: #{tpu_custom_call.1} parent=1 // pred_region
      %s29 = ssub.s32 256, 256
      %30 = vsyncadd [#allocation7], %s29
      %s31 = sshll.u32 [#allocation6], 4
      %s32 = int_to_ptr.vmem [resolvable:$true] %s31
      %37 = dma.hbm_to_vmem [thread:$0]  %s1, 256, %s32, [#allocation7], 64, 64, 4
    $region9: #{tpu_custom_call.1} parent=1 // pred_fallthru
      _
    // Predicated region
    $region10: #{tpu_custom_call.1} parent=1 // pred_check
      _
    $region11: #{tpu_custom_call.1} parent=1 // pred_check_branch
      %39 = sbr.rel (0) target = $region13
    $region12: #{tpu_custom_call.1} parent=1 // pred_region
      _
    $region13: #{tpu_custom_call.1} parent=1 // pred_fallthru
      _
    // Predicated region
    $region14: #{tpu_custom_call.1} parent=1 // pred_check
      _
    $region15: #{tpu_custom_call.1} parent=1 // pred_check_branch
      %41 = sbr.rel (0) target = $region17
    $region16: #{tpu_custom_call.1} parent=1 // pred_region
      _
    $region17: #{tpu_custom_call.1} parent=1 // pred_fallthru
      _
    // Predicated region
    $region18: #{tpu_custom_call.1} parent=1 // pred_check
      _
    $region19: #{tpu_custom_call.1} parent=1 // pred_check_branch
      %43 = sbr.rel (0) target = $region21
    $region20: #{tpu_custom_call.1} parent=1 // pred_region
      _
    $region21: #{tpu_custom_call.1} parent=1 // pred_fallthru
      _
    // Predicated region
    $region22: #{tpu_custom_call.1} parent=1 // pred_check
      _
    $region23: #{tpu_custom_call.1} parent=1 // pred_check_branch
      %45 = sbr.rel (0) target = $region25
    $region24: #{tpu_custom_call.1} parent=1 // pred_region
      %46 = dma.done [#allocation4], 256
    $region25: #{tpu_custom_call.1} parent=1 // pred_fallthru
      _
    // Predicated region
    $region26: #{tpu_custom_call.1} parent=1 // pred_check
      _
    $region27: #{tpu_custom_call.1} parent=1 // pred_check_branch
      %48 = sbr.rel (0) target = $region29
    $region28: #{tpu_custom_call.1} parent=1 // pred_region
      %49 = dma.done [#allocation7], 256
    $region29: #{tpu_custom_call.1} parent=1 // pred_fallthru
      _
    %v51 = vld [vmem:[#allocation3] sm:$0xff]
    %v52 = vld [vmem:[#allocation3 + $0x8] sm:$0xff]
    %v53 = vpack.c.bf16 %v52, %v51
    %v54 = vld [vmem:[#allocation6] sm:$0xf]
    %v55 = vld [vmem:[#allocation6 + $0x4] sm:$0xf]
    %v56 = vld [vmem:[#allocation6 + $0x8] sm:$0xf]
    %v57 = vld [vmem:[#allocation6 + $0xc] sm:$0xf]
    %v58 = vld [vmem:[%s2] sm:$0x1]
    %v60 = vlaneseq
    %v61 = vshrl.u32 %v60, 7
    %v62 = vsub.s32 0, %v61
    %v63 = vrot.slane %v58, %v62
    %v69 = vunpack.c.l.b16 %v54
    %v70 = vunpack.c.l.b16 %v55
    %v71 = vunpack.c.l.b16 %v56
    %v72 = vunpack.c.l.b16 %v57
    %v73 = vpack.c.b16 %v70, %v69
    %v74 = vpack.c.b16 %v72, %v71
    %vm77 = vcmask 261120
    %v79 = vsel %vm77, %v53, 0
    %81 = vmatprep.subr.bf16.mxu0 0
    %82 = vmatpush1.bf16.msra.mxu0 %v73
    %83 = vmatprep.subr.bf16.mxu0 0
    %84 = vmatpush1.bf16.msra.mxu0 %v74
    %85 = vmatprep.subr.bf16.mxu0 0
    %86 = vmatpush1.bf16.msra.mxu0 0
    %87 = vmatprep.subr.bf16.mxu0 0
    %88 = vmatpush1.bf16.msra.mxu0 0
    %89 = vmatprep.subr.bf16.mxu0 0
    %90 = vmatpush1.bf16.msra.mxu0 0
    %91 = vmatprep.subr.bf16.mxu0 0
    %92 = vmatpush1.bf16.msra.mxu0 0
    %93 = vmatprep.subr.bf16.mxu0 0
    %94 = vmatpush1.bf16.msra.mxu0 0
    %95 = vmatprep.subr.bf16.mxu0 0
    %96 = vmatpush1.bf16.msra.mxu0 0
    %97 = vmatprep.subr.bf16.mxu0 0
    %98 = vmatpush1.bf16.msra.mxu0 0
    %99 = vmatprep.subr.bf16.mxu0 0
    %100 = vmatpush1.bf16.msra.mxu0 0
    %101 = vmatprep.subr.bf16.mxu0 0
    %102 = vmatpush1.bf16.msra.mxu0 0
    %103 = vmatprep.subr.bf16.mxu0 0
    %104 = vmatpush1.bf16.msra.mxu0 0
    %105 = vmatprep.subr.bf16.mxu0 0
    %106 = vmatpush1.bf16.msra.mxu0 0
    %107 = vmatprep.subr.bf16.mxu0 0
    %108 = vmatpush1.bf16.msra.mxu0 0
    %109 = vmatprep.subr.bf16.mxu0 0
    %110 = vmatpush1.bf16.msra.mxu0 0
    %111 = vmatprep.subr.bf16.mxu0 0
    %112 = vmatpush1.bf16.msra.mxu0 0
    %113 = vmatprep.mubr.bf16.mxu0 0
    %114 = vmatmul.mubr.bf16.gmra.mrb[0].mxu0 %v79
    %v115 = vpop.f32.mrb[0].mxu0
    %v116 = vadd.f32 %v63, %v115
    %v117 = vpop.f32.mrb[0].mxu0
    %v118 = vpop.f32.mrb[0].mxu0
    %v119 = vadd.f32 %v63, %v118
    %v120 = vpop.f32.mrb[0].mxu0
    %121 = vdwg.mxu0
    %v122 = vtanh.pop %v116
    %v123 = vtanh.pop %v119
    %v124 = vld [vmem:[%s3] sm:$0x1]
    %v126 = vlaneseq
    %v127 = vshrl.u32 %v126, 7
    %v128 = vsub.s32 0, %v127
    %v129 = vrot.slane %v124, %v128
    %v131 = vmul.f32 %v122, %v129
    %v132 = vmul.f32 %v123, %v129
    %133 = vadd.xlane.f32.xlu0 %v131
    %v134 = vpop.xlane.xlu0 %133
    %135 = vadd.xlane.f32.xlu0 %v132
    %v136 = vpop.xlane.xlu0 %135
    %s137 = sld [smem:[#allocation2]]
    %v138 = vstv %s137
    %v139 = vadd.f32 %v134, %v138
    %v140 = vadd.f32 %v136, %v138
    %v141 = vmul.f32 %v122, %v139
    %v142 = vmul.f32 %v123, %v140
    %v143 = vrot.slane %v141, 4
    %v144 = vadd.f32 %v141, %v143
    %v145 = vrot.slane %v144, 2
    %v146 = vadd.f32 %v144, %v145
    %v147 = vrot.slane %v146, 1
    %v148 = vadd.f32 %v146, %v147
    %v149 = vrot.slane %v142, 4
    %v150 = vadd.f32 %v142, %v149
    %v151 = vrot.slane %v150, 2
    %v152 = vadd.f32 %v150, %v151
    %v153 = vrot.slane %v152, 1
    %v154 = vadd.f32 %v152, %v153
    %vm157 = vcmask 1041409
    %v158 = vsel %vm157, %v154, %v148
    %160 = vst [vmem:[#allocation8] sm:$0x3] %v158
    // Predicated region
    $region30: #{tpu_custom_call.1} parent=1 // pred_check
      _
    $region31: #{tpu_custom_call.1} parent=1 // pred_check_branch
      %162 = sbr.rel (0) target = $region33
    $region32: #{tpu_custom_call.1} parent=1 // pred_region
      %s164 = ssub.s32 32, 32
      %165 = vsyncadd [#allocation5], %s164
      %s167 = sshll.u32 [#allocation8], 4
      %s168 = int_to_ptr.vmem [resolvable:$true] %s167
      %170 = dma.vmem_to_hbm [thread:$0]  %s168, 32, %s5, [#allocation5]
    $region33: #{tpu_custom_call.1} parent=1 // pred_fallthru
      _
    // Predicated region
    $region34: #{tpu_custom_call.1} parent=1 // pred_check
      _
    $region35: #{tpu_custom_call.1} parent=1 // pred_check_branch
      %172 = sbr.rel (0) target = $region37
    $region36: #{tpu_custom_call.1} parent=1 // pred_region
      %173 = dma.done [#allocation5], 32
    $region37: #{tpu_custom_call.1} parent=1 // pred_fallthru
      _
    %174 = vsyncpa [#allocation4], 1
    %175 = vsyncpa [#allocation7], 1
    %176 = vsyncpa [#allocation5], 1

</llo_original>
